<compile_context>
chip_gen: v5e
topology: v5e:2x2
jax: 0.10.0
libtpu: 0.0.40
codegen_flags: <defaults>
</compile_context>

<pallas_src>
import functools

import jax
import jax.numpy as jnp
from jax.experimental import pallas as pl
from jax.experimental.pallas import tpu as pltpu


def _pad_amounts(n, d, row_mult=8, col_mult=128):
    return (-n) % row_mult, (-d) % col_mult


# ----------------------------------------------------------------------------
# Kernel 1: classes = sigmoid(cls)   (max_classes is None path)
# ----------------------------------------------------------------------------
def _sigmoid_kernel(cls_ref, out_ref):
    x = cls_ref[...].astype(jnp.float32)
    # Single EUP transcendental, numerically stable for large |x|.
    out_ref[...] = (0.5 * (jnp.tanh(0.5 * x) + 1.0)).astype(out_ref.dtype)


def sigmoid_classes(cls_param):
    n, d = cls_param.shape
    pr, pc = _pad_amounts(n, d)
    x = cls_param
    if pr or pc:
        x = jnp.pad(x, ((0, pr), (0, pc)))  # pad value irrelevant; sliced off
    np_, dp_ = x.shape
    out = pl.pallas_call(
        _sigmoid_kernel,
        out_shape=jax.ShapeDtypeStruct((np_, dp_), cls_param.dtype),
        grid_spec=pltpu.PrefetchScalarGridSpec(
            num_scalar_prefetch=0,
            grid=(1,),
            in_specs=[pl.BlockSpec((np_, dp_), lambda i: (0, 0))],
            out_specs=pl.BlockSpec((np_, dp_), lambda i: (0, 0)),
        ),
        compiler_params=pltpu.CompilerParams(
            dimension_semantics=("arbitrary",)),
    )(x)
    if pr or pc:
        out = out[:n, :d]
    return out


# ----------------------------------------------------------------------------
# Kernel 2: classes = differentiable_topk(cls, k, temperature)
#
# torch semantics (per row, k static):
#   p = softmax(x / temperature); v, idx = top-1 of p (first occurrence);
#   acc += one_hot(idx) * v;  x = x.scatter(idx, -inf)  (except last iter)
#
# Incremental equivalent: with m0 = max(x/t), e = exp(x/t - m0), s = sum(e),
# the top-1 probability at step i is max(e_remaining) / s_remaining, because
# softmax ratios are shift-invariant.  So exp/sum run once; per step we only
# peel the winning e out of the running sum.
# ----------------------------------------------------------------------------
def _diff_topk_kernel(cls_ref, out_ref, *, k, inv_temperature):
    x = cls_ref[...].astype(jnp.float32) * jnp.float32(inv_temperature)
    n, dim = x.shape
    col = jax.lax.broadcasted_iota(jnp.int32, (n, dim), dimension=1)

    # exp / sum computed ONCE (padded -inf lanes -> e == 0, never selected).
    m0 = jnp.max(x, axis=-1, keepdims=True)
    e = jnp.exp(x - m0)                       # x dead after this point
    s = jnp.sum(e, axis=-1, keepdims=True)

    acc = jnp.zeros((n, dim), jnp.float32)
    for i in range(k):  # k is small and static -> unrolled
        vmax_e = jnp.max(e, axis=-1, keepdims=True)
        # first occurrence of the max (torch.topk(1) semantics); exact-equality
        # test is on e itself, pre-division, so tie-breaking stays exact.
        idx = jnp.min(jnp.where(e == vmax_e, col, dim), axis=-1, keepdims=True)
        onehot = col == idx
        # only a per-row (n,1) divide; no full-block p = e / s.
        acc = acc + jnp.where(onehot, vmax_e / s, jnp.float32(0.0))
        if i != k - 1:
            e = jnp.where(onehot, jnp.float32(0.0), e)
            s = s - vmax_e

    out_ref[...] = acc.astype(out_ref.dtype)


def differentiable_topk_classes(cls_param, k, temperature):
    n, d = cls_param.shape
    pr, pc = _pad_amounts(n, d)
    x = cls_param
    if pr:
        x = jnp.pad(x, ((0, pr), (0, 0)))                      # rows: value irrelevant
    if pc:
        x = jnp.pad(x, ((0, 0), (0, pc)), constant_values=-jnp.inf)  # lanes: never win
    np_, dp_ = x.shape
    kern = functools.partial(_diff_topk_kernel, k=k,
                             inv_temperature=1.0 / float(temperature))
    out = pl.pallas_call(
        kern,
        out_shape=jax.ShapeDtypeStruct((np_, dp_), cls_param.dtype),
        grid_spec=pltpu.PrefetchScalarGridSpec(
            num_scalar_prefetch=0,
            grid=(1,),
            in_specs=[pl.BlockSpec((np_, dp_), lambda i: (0, 0))],
            out_specs=pl.BlockSpec((np_, dp_), lambda i: (0, 0)),
        ),
        compiler_params=pltpu.CompilerParams(
            dimension_semantics=("arbitrary",)),
    )(x)
    if pr or pc:
        out = out[:n, :d]
    return out


# ----------------------------------------------------------------------------
# Latents module (JAX wrapper)
# ----------------------------------------------------------------------------
class Latents:
    def __init__(self, key, num_latents=15, num_classes=1000, z_dim=128,
                 max_classes=None, class_temperature=2.0):
        k1, k2 = jax.random.split(key)
        # torch.zeros(...).normal_(std=1)
        self.normu = jax.random.normal(k1, (num_latents, z_dim), jnp.float32)
        # torch.zeros(...).normal_(mean=-3.9, std=0.3)
        self.cls = -3.9 + 0.3 * jax.random.normal(
            k2, (num_latents, num_classes), jnp.float32)
        self.thresh_lat = jnp.array(1)  # buffer, unused in forward
        assert max_classes is None or (0 < max_classes <= num_classes)
        self.max_classes = max_classes
        self.class_temperature = class_temperature

    def __call__(self):
        if self.max_classes is not None:
            classes = differentiable_topk_classes(
                self.cls, self.max_classes, self.class_temperature)
        else:
            classes = sigmoid_classes(self.cls)
        return self.normu, classes


# ----------------------------------------------------------------------------
# Pure-JAX reference for a sanity check (mirrors torch differentiable_topk)
# ----------------------------------------------------------------------------
def _ref_diff_topk(x, k, temperature):
    n, dim = x.shape
    acc = jnp.zeros_like(x)
    xi = x
    for i in range(k):
        p = jax.nn.softmax(xi / temperature, axis=-1)
        idx = jnp.argmax(p, axis=-1)
        v = jnp.take_along_axis(p, idx[:, None], axis=-1)
        oh = jax.nn.one_hot(idx, dim, dtype=x.dtype)
        acc = acc + oh * v
        if i != k - 1:
            xi = jnp.where(oh > 0, -jnp.inf, xi)
    return acc


if __name__ == "__main__":
    key = jax.random.PRNGKey(0)

    # Path 1: default (max_classes=None) -> sigmoid kernel.  Lane-aligned shape.
    lat_sig = Latents(key, num_latents=8, num_classes=128, z_dim=32,
                      max_classes=None)
    normu1, classes1 = lat_sig()
    jax.block_until_ready((normu1, classes1))
    ref1 = jax.nn.sigmoid(lat_sig.cls)
    assert classes1.shape == (8, 128)
    assert jnp.allclose(classes1, ref1, atol=1e-5), "sigmoid path mismatch"

    # Path 2: max_classes=3 -> incremental differentiable_topk kernel.
    lat_topk = Latents(key, num_latents=8, num_classes=128, z_dim=32,
                       max_classes=3, class_temperature=2.0)
    normu2, classes2 = lat_topk()
    jax.block_until_ready((normu2, classes2))
    ref2 = _ref_diff_topk(lat_topk.cls, 3, 2.0)
    assert normu2.shape == (8, 32) and classes2.shape == (8, 128)
    assert jnp.allclose(classes2, ref2, atol=1e-5), "differentiable_topk path mismatch"

    # Path 3: module-default shapes (15 x 1000) exercise the lane/sublane
    # padding (-inf on padded class lanes) on both kernels.
    lat_def_sig = Latents(key, max_classes=None)          # 15 x 1000, sigmoid
    _, classes3 = lat_def_sig()
    jax.block_until_ready(classes3)
    assert classes3.shape == (15, 1000)
    assert jnp.allclose(classes3, jax.nn.sigmoid(lat_def_sig.cls), atol=1e-5)

    lat_def_topk = Latents(key, max_classes=4, class_temperature=2.0)
    _, classes4 = lat_def_topk()
    jax.block_until_ready(classes4)
    ref4 = _ref_diff_topk(lat_def_topk.cls, 4, 2.0)
    assert classes4.shape == (15, 1000)
    assert jnp.allclose(classes4, ref4, atol=1e-5), "padded topk path mismatch"

    print("KERNEL_OK")
</pallas_src>

<mosaic_0001>
module attributes {stable_mosaic.version = 11 : i64} {
  func.func @_sigmoid_kernel(%arg0: i32, %arg1: memref<8x128xf32, #tpu.memory_space<vmem>>, %arg2: memref<8x128xf32, #tpu.memory_space<vmem>>) attributes {dimension_semantics = [#tpu.dimension_semantics<arbitrary>], iteration_bounds = array<i64: 1>, scalar_prefetch = 0 : i64, scratch_operands = 0 : i64, tpu.core_type = #tpu.core_type<tc>, window_params = [{pipeline_mode = #tpu.pipeline_mode<synchronous>, transform_indices = @transform_0, window_bounds = array<i64: 8, 128>}, {pipeline_mode = #tpu.pipeline_mode<synchronous>, transform_indices = @transform_1, window_bounds = array<i64: 8, 128>}]} {
    %c0 = arith.constant 0 : index
    %c0_0 = arith.constant 0 : index
    %0 = vector.load %arg1[%c0, %c0_0] : memref<8x128xf32, #tpu.memory_space<vmem>>, vector<8x128xf32>
    %cst = arith.constant 5.000000e-01 : f32
    %1 = vector.broadcast %cst : f32 to vector<8x128xf32>
    %2 = arith.mulf %1, %0 : vector<8x128xf32>
    %3 = math.tanh %2 : vector<8x128xf32>
    %cst_1 = arith.constant 1.000000e+00 : f32
    %4 = vector.broadcast %cst_1 : f32 to vector<8x128xf32>
    %5 = arith.addf %3, %4 : vector<8x128xf32>
    %cst_2 = arith.constant 5.000000e-01 : f32
    %6 = vector.broadcast %cst_2 : f32 to vector<8x128xf32>
    %7 = arith.mulf %6, %5 : vector<8x128xf32>
    %c0_3 = arith.constant 0 : index
    %c0_4 = arith.constant 0 : index
    %8 = vector.load %arg2[%c0_3, %c0_4] : memref<8x128xf32, #tpu.memory_space<vmem>>, vector<8x128xf32>
    tpu.vector_store %arg2[%c0_3, %c0_4], %7 {strides = array<i32>} : memref<8x128xf32, #tpu.memory_space<vmem>>, vector<8x128xf32>,
    return
  }
  func.func @transform_0(%arg0: i32) -> (i32, i32) {
    %c0_i32 = arith.constant 0 : i32
    %c0_i32_0 = arith.constant 0 : i32
    %c0_i32_1 = arith.constant 0 : i32
    return %c0_i32, %c0_i32_0 : i32, i32
  }
  func.func @transform_1(%arg0: i32) -> (i32, i32) {
    %c0_i32 = arith.constant 0 : i32
    %c0_i32_0 = arith.constant 0 : i32
    %c0_i32_1 = arith.constant 0 : i32
    return %c0_i32, %c0_i32_0 : i32, i32
  }
}

</mosaic_0001>

<llo_original>
// kernel: tpu_custom_call.1
$region0: #{tpu_custom_call.1}
  #allocation0 [shape = 'u32[]', space=smem, size = 0x4, offset = 0x4, fixed_abs, tag = 'smem constant byte address 0x4 - core index']
  #allocation1 [shape = 'u32[72,128]{1,0:T(1,128)}', space=vmem, size = 0x9000, scoped, tag = 'internal scratch']
  %s0 = inlined_call_operand.hbm [shape: f32[8,128], index: 0, kind: input, shape index: {}]
  %s1 = inlined_call_operand.hbm [shape: f32[8,128], index: 1, kind: output, shape index: {}]
  %s2 = sld [smem:[#allocation0]]
  $region18: #{tpu_custom_call.1} parent=0
    _
  %s4 = ssub.s32 1, %s2
  %s5 = scalar_select 0, %s4, %s2
  $region1: #{tpu_custom_call.1} parent=0
    #allocation2 [shape = 'u8[4096]{0}', space=vmem, size = 0x1000, scoped, tag = 'input window, operand 0, single buffered']
    #allocation3 [shape = 's32[1]{0}', space=sflag, size = 0x4, scoped, tag = 'scoped memory for tpu_custom_call.1']
    #allocation4 [shape = 's32[1]{0}', space=sflag, size = 0x4, scoped, tag = 'scoped memory for tpu_custom_call.1']
    #allocation5 [shape = 'u8[4096]{0}', space=vmem, size = 0x1000, scoped, tag = 'output window, operand 0, single buffered']
    %6 = vsyncpa [#allocation3], 0
    %7 = vsyncpa [#allocation4], 0
    // Predicated region
    $region2: #{tpu_custom_call.1} parent=1 // pred_check
      _
    $region3: #{tpu_custom_call.1} parent=1 // pred_check_branch
      %9 = sbr.rel (0) target = $region5
    $region4: #{tpu_custom_call.1} parent=1 // pred_region
      %11 = vsyncadd [#allocation3], 0
      %s13 = sshll.u32 %s0, 4
      %s14 = int_to_ptr.hbm [resolvable:$true] %s13
      %s15 = sshll.u32 [#allocation2], 4
      %s16 = int_to_ptr.vmem [resolvable:$true] %s15
      %18 = dma.hbm_to_vmem [thread:$0]  %s14, 128, %s16, [#allocation3]
    $region5: #{tpu_custom_call.1} parent=1 // pred_fallthru
      _
    // Predicated region
    $region6: #{tpu_custom_call.1} parent=1 // pred_check
      _
    $region7: #{tpu_custom_call.1} parent=1 // pred_check_branch
      %20 = sbr.rel (0) target = $region9
    $region8: #{tpu_custom_call.1} parent=1 // pred_region
      %22 = dma.done [#allocation3], 128
    $region9: #{tpu_custom_call.1} parent=1 // pred_fallthru
      _
    %v23 = vld [vmem:[#allocation2] sm:$0xff]
    %v24 = vmul.f32 %v23, 0.5
    %v25 = vtanh.pop %v24
    %v26 = vadd.f32 %v25, 1.0
    %v27 = vmul.f32 %v26, 0.5
    %28 = vst [vmem:[#allocation5] sm:$0xff] %v27
    // Predicated region
    $region10: #{tpu_custom_call.1} parent=1 // pred_check
      _
    $region11: #{tpu_custom_call.1} parent=1 // pred_check_branch
      %30 = sbr.rel (0) target = $region13
    $region12: #{tpu_custom_call.1} parent=1 // pred_region
      %32 = vsyncadd [#allocation4], 0
      %s34 = sshll.u32 [#allocation5], 4
      %s35 = int_to_ptr.vmem [resolvable:$true] %s34
      %s36 = sshll.u32 %s1, 4
      %s37 = int_to_ptr.hbm [resolvable:$true] %s36
      %39 = dma.vmem_to_hbm [thread:$0]  %s35, 128, %s37, [#allocation4]
    $region13: #{tpu_custom_call.1} parent=1 // pred_fallthru
      _
    // Predicated region
    $region14: #{tpu_custom_call.1} parent=1 // pred_check
      _
    $region15: #{tpu_custom_call.1} parent=1 // pred_check_branch
      %41 = sbr.rel (0) target = $region17
    $region16: #{tpu_custom_call.1} parent=1 // pred_region
      %43 = dma.done [#allocation4], 128
    $region17: #{tpu_custom_call.1} parent=1 // pred_fallthru
      _
    %44 = vsyncpa [#allocation3], 1
    %45 = vsyncpa [#allocation4], 1

</llo_original>
